<compile_context>
chip_gen: v7x
topology: tpu7x:2x2x1
jax: 0.10.0
libtpu: 0.0.40
codegen_flags: <defaults>
</compile_context>

<pallas_src>
import functools

import numpy as np
import jax
import jax.numpy as jnp
from jax import lax
from jax.experimental import pallas as pl
from jax.experimental.pallas import tpu as pltpu


def _round_up(a, m):
    return ((a + m - 1) // m) * m


def _cdiv(a, b):
    return -(-a // b)


def _sublane_quantum(dtype):
    # 32-bit rows pack 8 per vreg sublane group; 16-bit pack 16; 8-bit pack 32.
    itemsize = jnp.dtype(dtype).itemsize
    return max(8, 32 // max(1, itemsize))


def _device_kind():
    try:
        return jax.devices()[0].device_kind.lower()
    except Exception:  # pragma: no cover - CPU/interpret fallbacks
        return ""


def _pick_batch_tile(b, n, itemsize, q, vmem_budget_bytes, target_x_bytes):
    """Largest sublane-aligned batch tile that fits the VMEM budget and keeps
    >= 2 grid steps whenever the batch allows it."""
    row_bytes = n * itemsize
    # Per grid step: double-buffered x-in + out tiles plus the resident scale row:
    #   ~ (2 + 2) * bt * row_bytes + 2 * row_bytes  <=  vmem_budget_bytes
    budget_rows = (vmem_budget_bytes // row_bytes - 2) // 4
    budget_rows = max(q, (budget_rows // q) * q)
    # TODO(synk): if even a q-row block exceeds the budget (enormous seq*d_model),
    # the lane dim would also need tiling (two-pass reduction); not needed here.

    # Enough bytes of x per step to amortize the ~600-cycle per-step overhead.
    target_rows = _round_up(max(1, _cdiv(target_x_bytes, row_bytes)), q)
    bt_max = min(budget_rows, target_rows)

    b_q = _round_up(b, q)          # minimal sublane-aligned (padded) batch
    bt_max = min(bt_max, b_q)

    # >= 2 grid steps whenever possible: keeps software pipelining alive and lets
    # dimension_semantics=("parallel",) shard the batch across v7x's 2 TCs.
    min_steps = 2 if b_q >= 2 * q else 1
    steps = max(min_steps, _cdiv(b_q, bt_max))
    bt = _round_up(_cdiv(b_q, steps), q)
    return bt, steps


def rmsnorm_kernel(x_ref, scale_ref, o_ref, *, sqrt_n, low_precision):
    # x_ref: (bt, n)   scale_ref: (1, n)   o_ref: (bt, n)   with n = seq * d_model
    x = x_ref[...]
    xf = x.astype(jnp.float32)
    ssq = jnp.sum(xf * xf, axis=-1, keepdims=True)       # (bt, 1) cross-lane reduce, f32
    inv_ff_rms = sqrt_n * lax.rsqrt(ssq)                  # 1/(||x||/sqrt(n)), EUP slot
    # NOTE: no eps is applied, faithfully matching the PyTorch module (its eps is
    # unused in forward); an all-zero row therefore yields inf/NaN as in torch.
    if low_precision:
        # v6e/v7x bf16 VALU path: elementwise work stays in the native 16-bit dtype.
        out = x * inv_ff_rms.astype(x.dtype) * scale_ref[...]
    else:
        out = xf * inv_ff_rms * scale_ref[...].astype(jnp.float32)
    o_ref[...] = out.astype(o_ref.dtype)


def rms_norm(x, scale, *, batch_tile=None, low_precision=None,
             vmem_budget_bytes=12 << 20):
    """x: (batch, seq, d_model); scale: (context_window, d_model)."""
    b, m, d = x.shape
    n = m * d
    itemsize = jnp.dtype(x.dtype).itemsize
    q = _sublane_quantum(x.dtype)

    kind = _device_kind()
    is_v5 = "v5" in kind

    if low_precision is None:
        # bf16 VALU exists on v6e/v7x but not v5e: keep f32 elementwise on v5*.
        low_precision = (itemsize <= 2) and not is_v5

    # v5e's lower HBM bandwidth amortizes step overhead sooner -> smaller target.
    target_x_bytes = (1 << 20) if is_v5 else (2 << 20)

    if batch_tile is None:
        batch_tile, grid_steps = _pick_batch_tile(
            b, n, itemsize, q, vmem_budget_bytes, target_x_bytes)
    else:
        assert batch_tile % q == 0, "batch_tile must be sublane-aligned for dtype"
        grid_steps = _cdiv(_round_up(b, q), batch_tile)
    b_pad = batch_tile * grid_steps

    # Lane-dense slab; pad ragged batches to the tile grid (trimmed after).
    x2 = x.reshape(b, n)
    if b_pad > b:
        x2 = jnp.pad(x2, ((0, b_pad - b), (0, 0)), constant_values=1.0)

    scale_dtype = x.dtype if low_precision else jnp.float32
    scale2 = scale[:m, :].reshape(1, n).astype(scale_dtype)   # torch's scale[:seq, :]

    # Explicit scoped-VMEM limit with headroom; capped so it is safe on every
    # generation (v7x physical VMEM is only 64 MiB).
    needed_vmem = (4 * batch_tile + 2) * n * itemsize
    vmem_limit = int(min(32 << 20, max(16 << 20, needed_vmem + (4 << 20))))

    cost = pl.CostEstimate(
        flops=3 * b_pad * n,
        transcendentals=b_pad,
        bytes_accessed=(2 * b_pad * n + n) * itemsize,
    )

    kernel = functools.partial(
        rmsnorm_kernel, sqrt_n=float(np.sqrt(n)), low_precision=low_precision)

    out2 = pl.pallas_call(
        kernel,
        out_shape=jax.ShapeDtypeStruct((b_pad, n), x.dtype),
        grid_spec=pltpu.PrefetchScalarGridSpec(
            num_scalar_prefetch=0,
            grid=(grid_steps,),
            in_specs=[
                pl.BlockSpec((batch_tile, n), lambda i: (i, 0)),   # x rows for this tile
                pl.BlockSpec((1, n), lambda i: (0, 0)),            # scale, VMEM-resident
            ],
            out_specs=pl.BlockSpec((batch_tile, n), lambda i: (i, 0)),
        ),
        compiler_params=pltpu.CompilerParams(
            dimension_semantics=("parallel",),
            vmem_limit_bytes=vmem_limit),
        cost_estimate=cost,
    )(x2, scale2)
    return out2[:b].reshape(b, m, d)


def reference_forward(x, scale):
    """Pure-JAX mirror of the PyTorch RMSNorm.forward."""
    b, m, d = x.shape
    ff_rms = jnp.linalg.norm(x.reshape(b, -1), axis=-1) * (m * d) ** (-0.5)
    raw = x / ff_rms[:, None, None]
    return scale[:m, :][None, :, :] * raw


if __name__ == "__main__":
    # x is (batch, seq_len, d_model); the scale parameter is (context_window, d_model)
    # and is sliced to seq_len inside forward, exactly like the torch module.
    batch, seq, d_model = 2, 8, 32
    context_window = 16

    key = jax.random.PRNGKey(0)
    kx, ks = jax.random.split(key)
    x = jax.random.normal(kx, (batch, seq, d_model), dtype=jnp.float32)
    # nn.Parameter(torch.ones(...)) is the init; use a deterministic non-trivial
    # scale so the scale-slice/broadcast path is actually exercised.
    scale = 1.0 + 0.1 * jax.random.normal(
        ks, (context_window, d_model), dtype=jnp.float32)

    out = rms_norm(x, scale)
    out = jax.block_until_ready(out)

    ref = reference_forward(x, scale)
    np.testing.assert_allclose(np.asarray(out), np.asarray(ref), rtol=1e-5, atol=1e-5)

    print("KERNEL_OK")
</pallas_src>

<mosaic_0001>
module attributes {stable_mosaic.version = 11 : i64} {
  func.func @rmsnorm_kernel(%arg0: i32, %arg1: memref<8x256xf32, #tpu.memory_space<vmem>>, %arg2: memref<1x256xf32, #tpu.memory_space<vmem>>, %arg3: memref<8x256xf32, #tpu.memory_space<vmem>>) attributes {dimension_semantics = [#tpu.dimension_semantics<parallel>], iteration_bounds = array<i64: 1>, scalar_prefetch = 0 : i64, scratch_operands = 0 : i64, tpu.core_type = #tpu.core_type<tc>, window_params = [{transform_indices = @transform_0, window_bounds = array<i64: 8, 256>}, {pipeline_mode = #tpu.pipeline_mode<synchronous>, transform_indices = @transform_1, window_bounds = array<i64: 1, 256>}, {transform_indices = @transform_2, window_bounds = array<i64: 8, 256>}]} {
    %c0 = arith.constant 0 : index
    %c0_0 = arith.constant 0 : index
    %0 = vector.load %arg1[%c0, %c0_0] : memref<8x256xf32, #tpu.memory_space<vmem>>, vector<8x256xf32>
    %1 = arith.mulf %0, %0 : vector<8x256xf32>
    %cst = arith.constant dense<0.000000e+00> : vector<8xf32>
    %2 = vector.multi_reduction <add>, %1, %cst [1] : vector<8x256xf32> to vector<8xf32>
    %3 = vector.shape_cast %2 : vector<8xf32> to vector<8x1xf32>
    %4 = math.rsqrt %3 : vector<8x1xf32>
    %cst_1 = arith.constant 1.600000e+01 : f32
    %5 = vector.broadcast %cst_1 : f32 to vector<8x1xf32>
    %6 = arith.mulf %5, %4 : vector<8x1xf32>
    %7 = vector.broadcast %6 : vector<8x1xf32> to vector<8x256xf32>
    %8 = arith.mulf %0, %7 : vector<8x256xf32>
    %c0_2 = arith.constant 0 : index
    %c0_3 = arith.constant 0 : index
    %9 = vector.load %arg2[%c0_2, %c0_3] : memref<1x256xf32, #tpu.memory_space<vmem>>, vector<1x256xf32>
    %10 = vector.broadcast %9 : vector<1x256xf32> to vector<8x256xf32>
    %11 = arith.mulf %8, %10 : vector<8x256xf32>
    %c0_4 = arith.constant 0 : index
    %c0_5 = arith.constant 0 : index
    %12 = vector.load %arg3[%c0_4, %c0_5] : memref<8x256xf32, #tpu.memory_space<vmem>>, vector<8x256xf32>
    tpu.vector_store %arg3[%c0_4, %c0_5], %11 {strides = array<i32>} : memref<8x256xf32, #tpu.memory_space<vmem>>, vector<8x256xf32>,
    return
  }
  func.func @transform_0(%arg0: i32) -> (i32, i32) {
    %c0_i32 = arith.constant 0 : i32
    %c0_i32_0 = arith.constant 0 : i32
    return %arg0, %c0_i32 : i32, i32
  }
  func.func @transform_1(%arg0: i32) -> (i32, i32) {
    %c0_i32 = arith.constant 0 : i32
    %c0_i32_0 = arith.constant 0 : i32
    %c0_i32_1 = arith.constant 0 : i32
    return %c0_i32, %c0_i32_0 : i32, i32
  }
  func.func @transform_2(%arg0: i32) -> (i32, i32) {
    %c0_i32 = arith.constant 0 : i32
    %c0_i32_0 = arith.constant 0 : i32
    return %arg0, %c0_i32 : i32, i32
  }
}

</mosaic_0001>

<llo_original>
// kernel: tpu_custom_call.1
$region0: #{tpu_custom_call.1}
  #allocation0 [shape = 'u32[]', space=smem, size = 0x4, offset = 0x4, fixed_abs, tag = 'smem constant byte address 0x4 - core index']
  #allocation1 [shape = 'u32[144,128]{1,0:T(1,128)}', space=vmem, size = 0x12000, scoped, tag = 'internal scratch']
  %s0 = inlined_call_operand.hbm [shape: f32[8,256], index: 0, kind: input, shape index: {}]
  %s1 = inlined_call_operand.vmem [shape: f32[1,256], index: 1, kind: input, shape index: {}]
  %s2 = inlined_call_operand.hbm [shape: f32[8,256], index: 2, kind: output, shape index: {}]
  %s3 = sld [smem:[#allocation0]]
  $region22: #{tpu_custom_call.1} parent=0
    _
  %s5 = ssub.s32 1, %s3
  %s6 = scalar_select 0, %s5, %s3
  $region1: #{tpu_custom_call.1} parent=0
    #allocation2 [shape = 'u8[8192]{0}', space=vmem, size = 0x2000, scoped, tag = 'input window, operand 0, single buffered']
    #allocation3 [shape = 's32[1]{0}', space=sflag, size = 0x4, scoped, tag = 'scoped memory for tpu_custom_call.1']
    #allocation4 [shape = 's32[1]{0}', space=sflag, size = 0x4, scoped, tag = 'scoped memory for tpu_custom_call.1']
    #allocation5 [shape = 'u8[8192]{0}', space=vmem, size = 0x2000, scoped, tag = 'output window, operand 0, single buffered']
    %7 = vsyncpa [#allocation3], 0
    %8 = vsyncpa [#allocation4], 0
    // Predicated region
    $region2: #{tpu_custom_call.1} parent=1 // pred_check
      _
    $region3: #{tpu_custom_call.1} parent=1 // pred_check_branch
      %10 = sbr.rel (0) target = $region5
    $region4: #{tpu_custom_call.1} parent=1 // pred_region
      %s12 = ssub.s32 256, 256
      %13 = vsyncadd [#allocation3], %s12
      %s15 = sshll.u32 [#allocation2], 4
      %s16 = int_to_ptr.vmem [resolvable:$true] %s15
      %18 = dma.hbm_to_vmem [thread:$0]  %s0, 256, %s16, [#allocation3]
    $region5: #{tpu_custom_call.1} parent=1 // pred_fallthru
      _
    // Predicated region
    $region6: #{tpu_custom_call.1} parent=1 // pred_check
      _
    $region7: #{tpu_custom_call.1} parent=1 // pred_check_branch
      %20 = sbr.rel (0) target = $region9
    $region8: #{tpu_custom_call.1} parent=1 // pred_region
      _
    $region9: #{tpu_custom_call.1} parent=1 // pred_fallthru
      _
    // Predicated region
    $region10: #{tpu_custom_call.1} parent=1 // pred_check
      _
    $region11: #{tpu_custom_call.1} parent=1 // pred_check_branch
      %22 = sbr.rel (0) target = $region13
    $region12: #{tpu_custom_call.1} parent=1 // pred_region
      %23 = dma.done [#allocation3], 256
    $region13: #{tpu_custom_call.1} parent=1 // pred_fallthru
      _
    %v24 = vld [vmem:[#allocation2] sm:$0xff]
    %v25 = vld [vmem:[#allocation2 + $0x8] sm:$0xff]
    %v26 = vmul.f32 %v24, %v24
    %v27 = vmul.f32 %v25, %v25
    %v28 = vadd.f32 %v26, %v27
    %29 = vadd.xlane.f32.xlu0 %v28
    %v30 = vpop.xlane.xlu0 %29
    %v31 = vrsqrt.pop %v30
    %v32 = vmul.f32 %v31, 16.0
    %v33 = vmul.f32 %v24, %v32
    %v34 = vmul.f32 %v25, %v32
    %v35 = vld [vmem:[%s1] sm:$0x3]
    %v37 = vlaneseq
    %v38 = vshrl.u32 %v37, 7
    %v39 = vsub.s32 0, %v38
    %v40 = vrot.slane %v35, %v39
    %v41 = vlaneseq
    %v42 = vshrl.u32 %v41, 7
    %v43 = vsub.s32 1, %v42
    %v44 = vrot.slane %v35, %v43
    %v47 = vmul.f32 %v33, %v40
    %v48 = vmul.f32 %v34, %v44
    %49 = vst [vmem:[#allocation5] sm:$0xff] %v47
    %50 = vst [vmem:[#allocation5 + $0x8] sm:$0xff] %v48
    // Predicated region
    $region14: #{tpu_custom_call.1} parent=1 // pred_check
      _
    $region15: #{tpu_custom_call.1} parent=1 // pred_check_branch
      %52 = sbr.rel (0) target = $region17
    $region16: #{tpu_custom_call.1} parent=1 // pred_region
      %s54 = ssub.s32 256, 256
      %55 = vsyncadd [#allocation4], %s54
      %s57 = sshll.u32 [#allocation5], 4
      %s58 = int_to_ptr.vmem [resolvable:$true] %s57
      %60 = dma.vmem_to_hbm [thread:$0]  %s58, 256, %s2, [#allocation4]
    $region17: #{tpu_custom_call.1} parent=1 // pred_fallthru
      _
    // Predicated region
    $region18: #{tpu_custom_call.1} parent=1 // pred_check
      _
    $region19: #{tpu_custom_call.1} parent=1 // pred_check_branch
      %62 = sbr.rel (0) target = $region21
    $region20: #{tpu_custom_call.1} parent=1 // pred_region
      %63 = dma.done [#allocation4], 256
    $region21: #{tpu_custom_call.1} parent=1 // pred_fallthru
      _
    %64 = vsyncpa [#allocation3], 1
    %65 = vsyncpa [#allocation4], 1

</llo_original>
